<compile_context>
chip_gen: v6e
topology: v6e:2x2x1
jax: 0.10.0
libtpu: 0.0.40
codegen_flags: <defaults>
</compile_context>

<pallas_src>
import functools

import jax
import jax.numpy as jnp
from jax.experimental import pallas as pl
from jax.experimental.pallas import tpu as pltpu


# ---------------------------------------------------------------------------
# Pallas kernel: one grid step == one (batch, C_out-tile) block.
# ---------------------------------------------------------------------------
def _cnn_block_kernel(x_ref, w_ref, bias_ref, o_ref, *, c_tile, lambda_val, precision):
    # x_ref:    (1, C_in, HW)      current batch's flattened feature map
    # w_ref:    (C_out_pad, C_in)  resident 1x1 conv weight with BN scale folded in
    # bias_ref: (C_out_pad, 1)     resident folded bias (conv bias + BN shift), f32
    # o_ref:    (1, c_tile, HW)
    x = x_ref[0]                                           # (C_in, HW)

    if w_ref.shape[0] == c_tile:
        # Single C_out tile: read the whole resident params (static path).
        w = w_ref[...]
        bias = bias_ref[...]
    else:
        # Slice this grid step's tile out of the resident params (no per-step DMA).
        c_start = pl.multiple_of(pl.program_id(1) * c_tile, 8)
        w = w_ref[pl.ds(c_start, c_tile), :]
        bias = bias_ref[pl.ds(c_start, c_tile), :]

    # --- 1x1 conv (+ folded BN scale) == channel matmul on the MXU, f32 acc ---
    y = jnp.dot(w, x, preferred_element_type=jnp.float32, precision=precision)
    # --- folded bias (conv bias + BN shift) + ReLU ---
    y = jnp.maximum(y + bias, 0.0)                         # (c_tile, HW) f32

    # --- SimAM ---
    hw = y.shape[1]
    inv_hw = 1.0 / float(hw)
    mu = jnp.sum(y, axis=1, keepdims=True) * inv_hw        # (c_tile, 1)
    d = (y - mu) ** 2                                      # reused by SimAM below
    var_sum = jnp.sum(d, axis=1, keepdims=True)            # exact two-pass variance
    var_est = var_sum / (float(hw - 1) + 1e-8)

    # One reciprocal per channel column; approx (EUP slot) on low-precision output.
    approx = jnp.dtype(o_ref.dtype) != jnp.float32
    inv_denom = pl.reciprocal(4.0 * (var_est + lambda_val) + 1e-8, approx=approx)

    e_inv = d * inv_denom + 0.5
    att = jax.nn.sigmoid(e_inv)
    o_ref[0] = (y * att).astype(o_ref.dtype)


# ---------------------------------------------------------------------------
# Wrapper: parameter folding, tiling, pallas_call plumbing.
# ---------------------------------------------------------------------------
def _vmem_capacity_bytes():
    try:
        cap = getattr(pltpu.get_tpu_info(), "vmem_capacity_bytes", None)
        if cap:
            return int(cap)
    except Exception:
        pass
    return 64 * 1024 * 1024          # conservative fallback (v7x-sized)


def _round_up(v, m):
    return ((v + m - 1) // m) * m


def cnn_block_forward(x_nchw, conv_w, conv_b, bn_gamma, bn_beta,
                      bn_running_mean, bn_running_var,
                      *, lambda_val=1e-4, bn_eps=1e-5,
                      matmul_dtype=jnp.float32, out_dtype=jnp.float32):
    """x_nchw: (B, C_in, H, W).  conv_w: (C_out, C_in, 1, 1).  Eval-mode BN."""
    B, C_in, H, W = x_nchw.shape
    C_out = conv_w.shape[0]
    HW = H * W

    # ---- fold conv bias + BatchNorm (running stats) into one weight & one bias
    w2d = conv_w.reshape(C_out, C_in).astype(jnp.float32)
    scale = (bn_gamma / jnp.sqrt(bn_running_var + bn_eps)).astype(jnp.float32)
    bias = (bn_beta + scale * (conv_b - bn_running_mean)).astype(jnp.float32)
    w_folded = scale[:, None] * w2d

    # ---- flatten spatial dims; no HW padding (block dim == full array dim) ----
    x_flat = x_nchw.reshape(B, C_in, HW)
    if x_flat.dtype != jnp.dtype(matmul_dtype):
        x_flat = x_flat.astype(matmul_dtype)   # ideally the producer supplies bf16 directly
    w_folded = w_folded.astype(matmul_dtype)

    # ---- C_out tiling from a generation-aware VMEM budget ---------------------
    in_item = jnp.dtype(matmul_dtype).itemsize
    out_item = jnp.dtype(out_dtype).itemsize
    # sublane packing unit (f32 -> 8, bf16 -> 16); c_tile must be a multiple of it
    sub = max(8 * (4 // in_item), 8 * (4 // out_item))
    c_out_min = _round_up(C_out, sub)

    vmem_cap = _vmem_capacity_bytes()
    budget = int(0.55 * vmem_cap)                               # compiler headroom
    x_db = 2 * C_in * HW * in_item                              # double-buffered x block
    params = 2 * (c_out_min * C_in * in_item + c_out_min * 512)  # resident w + bias
    # Per output row: double-buffered store block + ~4 f32 full-tile temporaries
    # (y, d, e_inv/att, slack) in the SimAM epilogue.
    per_row = HW * (2 * out_item + 4 * 4)
    avail = budget - x_db - params
    c_tile = (max(avail, per_row * sub) // per_row) // sub * sub
    c_tile = int(max(sub, min(c_out_min, c_tile)))
    if c_tile >= 256:                                           # MXU-friendly M dim
        c_tile = (c_tile // 256) * 256
    C_out_pad = _round_up(c_out_min, c_tile)
    n_c_tiles = C_out_pad // c_tile
    # TODO(synk): on v7x (64 MiB VMEM) a very large C_in*HW x block may not fit
    # double-buffered; a C_in-split "arbitrary" grid axis with an f32 VMEM
    # accumulator (or pipeline_mode=pl.Buffered(1) on x) would be the next step.

    if C_out_pad != C_out:
        w_folded = jnp.pad(w_folded, ((0, C_out_pad - C_out), (0, 0)))
        bias = jnp.pad(bias, ((0, C_out_pad - C_out),))
    bias_col = bias.reshape(C_out_pad, 1)

    needed = (x_db
              + 2 * (C_out_pad * C_in * in_item + C_out_pad * 512)
              + 2 * c_tile * HW * out_item
              + 4 * c_tile * HW * 4)
    vmem_limit = int(min(max(needed + (8 << 20), 32 << 20), int(0.75 * vmem_cap)))

    precision = (jax.lax.Precision.HIGHEST
                 if jnp.dtype(matmul_dtype) == jnp.float32 else None)
    kernel = functools.partial(_cnn_block_kernel, c_tile=c_tile,
                               lambda_val=float(lambda_val), precision=precision)

    out_flat = pl.pallas_call(
        kernel,
        out_shape=jax.ShapeDtypeStruct((B, C_out_pad, HW), out_dtype),
        grid_spec=pltpu.PrefetchScalarGridSpec(
            num_scalar_prefetch=0,
            grid=(B, n_c_tiles),
            in_specs=[
                # x: block index changes only with b -> re-fetched once per batch.
                pl.BlockSpec((1, C_in, HW), lambda b, c: (b, 0, 0)),
                # folded weight + bias: constant block index -> fetched once,
                # stays VMEM-resident for the whole grid.
                pl.BlockSpec((C_out_pad, C_in), lambda b, c: (0, 0)),
                pl.BlockSpec((C_out_pad, 1), lambda b, c: (0, 0)),
            ],
            out_specs=pl.BlockSpec((1, c_tile, HW), lambda b, c: (b, c, 0)),
        ),
        compiler_params=pltpu.CompilerParams(
            # Megacore split on the batch axis only: splitting the C_out axis
            # would make both v7x cores DMA the same x block.
            dimension_semantics=("parallel", "arbitrary"),
            vmem_limit_bytes=vmem_limit),
    )(x_flat, w_folded, bias_col)

    out = out_flat[:, :C_out, :].reshape(B, C_out, H, W)
    return out


# ---------------------------------------------------------------------------
# Pure-JAX reference (exact f32, no matmul-precision ambiguity).
# ---------------------------------------------------------------------------
def cnn_block_reference(x, conv_w, conv_b, gamma, beta, rmean, rvar,
                        *, lambda_val=1e-4, bn_eps=1e-5):
    B, C_in, H, W = x.shape
    C_out = conv_w.shape[0]
    w2d = conv_w.reshape(C_out, C_in)
    y = jnp.sum(w2d[None, :, :, None, None] * x[:, None, :, :, :], axis=2)
    y = y + conv_b[None, :, None, None]
    y = (y - rmean[None, :, None, None]) / jnp.sqrt(rvar[None, :, None, None] + bn_eps)
    y = y * gamma[None, :, None, None] + beta[None, :, None, None]
    y = jnp.maximum(y, 0.0)
    n = H * W - 1
    mu = y.mean(axis=(2, 3), keepdims=True)
    d = (y - mu) ** 2
    var_est = d.sum(axis=(2, 3), keepdims=True) / (n + 1e-8)
    e_inv = d / (4.0 * (var_est + lambda_val) + 1e-8) + 0.5
    return y * jax.nn.sigmoid(e_inv)


if __name__ == "__main__":
    key = jax.random.PRNGKey(0)
    k_x, k_w, k_b, k_g, k_be, k_rm, k_rv = jax.random.split(key, 7)

    B, C_in, C_out, H, W = 2, 4, 8, 16, 16

    x = jax.random.normal(k_x, (B, C_in, H, W), dtype=jnp.float32)

    # Deterministic synthetic parameters (Conv2d(4, 8, kernel_size=(1,1)),
    # BatchNorm2d(8) eval-mode running stats).
    conv_w = 0.1 * jax.random.normal(k_w, (C_out, C_in, 1, 1), dtype=jnp.float32)
    conv_b = 0.1 * jax.random.normal(k_b, (C_out,), dtype=jnp.float32)
    bn_gamma = 1.0 + 0.1 * jax.random.normal(k_g, (C_out,), dtype=jnp.float32)
    bn_beta = 0.1 * jax.random.normal(k_be, (C_out,), dtype=jnp.float32)
    bn_rmean = 0.05 * jax.random.normal(k_rm, (C_out,), dtype=jnp.float32)
    bn_rvar = 1.0 + 0.1 * jax.random.uniform(k_rv, (C_out,), dtype=jnp.float32)

    ref = cnn_block_reference(x, conv_w, conv_b, bn_gamma, bn_beta,
                              bn_rmean, bn_rvar, lambda_val=1e-4)

    # --- f32 path: tight check against the reference ---
    out = cnn_block_forward(x, conv_w, conv_b, bn_gamma, bn_beta,
                            bn_rmean, bn_rvar, lambda_val=1e-4,
                            matmul_dtype=jnp.float32, out_dtype=jnp.float32)
    out = jax.block_until_ready(out)
    assert out.shape == (B, C_out, H, W)
    assert out.dtype == jnp.float32
    assert jnp.allclose(out, ref, atol=1e-4, rtol=1e-4), "f32 path mismatch"

    # --- low-precision path: bf16 matmul operands + bf16 output store
    #     (halves both dominant HBM streams); f32 accumulation + f32 SimAM math ---
    out_lp = cnn_block_forward(x, conv_w, conv_b, bn_gamma, bn_beta,
                               bn_rmean, bn_rvar, lambda_val=1e-4,
                               matmul_dtype=jnp.bfloat16, out_dtype=jnp.bfloat16)
    out_lp = jax.block_until_ready(out_lp)
    assert out_lp.shape == (B, C_out, H, W)
    assert out_lp.dtype == jnp.bfloat16
    assert jnp.allclose(out_lp.astype(jnp.float32), ref, atol=5e-2, rtol=5e-2), \
        "bf16 path mismatch"

    print("KERNEL_OK")
</pallas_src>

<mosaic_0001>
module attributes {stable_mosaic.version = 11 : i64} {
  func.func @_cnn_block_kernel(%arg0: i32, %arg1: i32, %arg2: memref<1x4x256xf32, #tpu.memory_space<vmem>>, %arg3: memref<8x4xf32, #tpu.memory_space<vmem>>, %arg4: memref<8x1xf32, #tpu.memory_space<vmem>>, %arg5: memref<1x8x256xf32, #tpu.memory_space<vmem>>) attributes {dimension_semantics = [#tpu.dimension_semantics<parallel>, #tpu.dimension_semantics<arbitrary>], iteration_bounds = array<i64: 2, 1>, scalar_prefetch = 0 : i64, scratch_operands = 0 : i64, tpu.core_type = #tpu.core_type<tc>, window_params = [{transform_indices = @transform_0, window_bounds = array<i64: 1, 4, 256>}, {pipeline_mode = #tpu.pipeline_mode<synchronous>, transform_indices = @transform_1, window_bounds = array<i64: 8, 4>}, {pipeline_mode = #tpu.pipeline_mode<synchronous>, transform_indices = @transform_2, window_bounds = array<i64: 8, 1>}, {transform_indices = @transform_3, window_bounds = array<i64: 1, 8, 256>}]} {
    %c0 = arith.constant 0 : index
    %c0_0 = arith.constant 0 : index
    %c0_1 = arith.constant 0 : index
    %0 = vector.load %arg2[%c0, %c0_0, %c0_1] : memref<1x4x256xf32, #tpu.memory_space<vmem>>, vector<1x4x256xf32>
    %1 = vector.shape_cast %0 : vector<1x4x256xf32> to vector<4x256xf32>
    %c0_2 = arith.constant 0 : index
    %c0_3 = arith.constant 0 : index
    %2 = vector.load %arg3[%c0_2, %c0_3] : memref<8x4xf32, #tpu.memory_space<vmem>>, vector<8x4xf32>
    %c0_4 = arith.constant 0 : index
    %c0_5 = arith.constant 0 : index
    %3 = vector.load %arg4[%c0_4, %c0_5] : memref<8x1xf32, #tpu.memory_space<vmem>>, vector<8x1xf32>
    %cst = arith.constant dense<0.000000e+00> : vector<8x256xf32>
    %4 = tpu.matmul %2, %1, %cst {dimension_numbers = #tpu.dot_dimension_numbers<[1], [0], [0], [1], [0, 0, 1, 1], [], []>, precision = #tpu.contract_precision<fp32>} : vector<8x4xf32>, vector<4x256xf32>, vector<8x256xf32> -> vector<8x256xf32>
    %5 = vector.broadcast %3 : vector<8x1xf32> to vector<8x256xf32>
    %6 = arith.addf %4, %5 : vector<8x256xf32>
    %cst_6 = arith.constant 0.000000e+00 : f32
    %7 = vector.broadcast %cst_6 : f32 to vector<8x256xf32>
    %8 = arith.maximumf %6, %7 : vector<8x256xf32>
    %cst_7 = arith.constant dense<0.000000e+00> : vector<8xf32>
    %9 = vector.multi_reduction <add>, %8, %cst_7 [1] : vector<8x256xf32> to vector<8xf32>
    %10 = vector.shape_cast %9 : vector<8xf32> to vector<8x1xf32>
    %cst_8 = arith.constant 3.906250e-03 : f32
    %11 = vector.broadcast %cst_8 : f32 to vector<8x1xf32>
    %12 = arith.mulf %10, %11 : vector<8x1xf32>
    %13 = vector.broadcast %12 : vector<8x1xf32> to vector<8x256xf32>
    %14 = arith.subf %8, %13 : vector<8x256xf32>
    %15 = arith.mulf %14, %14 : vector<8x256xf32>
    %cst_9 = arith.constant dense<0.000000e+00> : vector<8xf32>
    %16 = vector.multi_reduction <add>, %15, %cst_9 [1] : vector<8x256xf32> to vector<8xf32>
    %17 = vector.shape_cast %16 : vector<8xf32> to vector<8x1xf32>
    %cst_10 = arith.constant 2.550000e+02 : f32
    %18 = vector.broadcast %cst_10 : f32 to vector<8x1xf32>
    %19 = arith.divf %17, %18 : vector<8x1xf32>
    %cst_11 = arith.constant 9.99999974E-5 : f32
    %20 = vector.broadcast %cst_11 : f32 to vector<8x1xf32>
    %21 = arith.addf %19, %20 : vector<8x1xf32>
    %cst_12 = arith.constant 4.000000e+00 : f32
    %22 = vector.broadcast %cst_12 : f32 to vector<8x1xf32>
    %23 = arith.mulf %22, %21 : vector<8x1xf32>
    %cst_13 = arith.constant 9.99999993E-9 : f32
    %24 = vector.broadcast %cst_13 : f32 to vector<8x1xf32>
    %25 = arith.addf %23, %24 : vector<8x1xf32>
    %26 = tpu.reciprocal %25 : vector<8x1xf32> -> vector<8x1xf32>
    %27 = vector.broadcast %26 : vector<8x1xf32> to vector<8x256xf32>
    %28 = arith.mulf %15, %27 : vector<8x256xf32>
    %cst_14 = arith.constant 5.000000e-01 : f32
    %29 = vector.broadcast %cst_14 : f32 to vector<8x256xf32>
    %30 = arith.addf %28, %29 : vector<8x256xf32>
    %31 = arith.negf %30 : vector<8x256xf32>
    %32 = math.exp %31 : vector<8x256xf32>
    %cst_15 = arith.constant 1.000000e+00 : f32
    %33 = vector.broadcast %cst_15 : f32 to vector<8x256xf32>
    %34 = arith.addf %33, %32 : vector<8x256xf32>
    %35 = arith.divf %33, %34 : vector<8x256xf32>
    %36 = arith.mulf %8, %35 : vector<8x256xf32>
    %c0_16 = arith.constant 0 : index
    %c0_17 = arith.constant 0 : index
    %c0_18 = arith.constant 0 : index
    %37 = vector.load %arg5[%c0_16, %c0_17, %c0_18] : memref<1x8x256xf32, #tpu.memory_space<vmem>>, vector<1x8x256xf32>
    %38 = vector.shape_cast %37 : vector<1x8x256xf32> to vector<8x256xf32>
    %39 = vector.shape_cast %36 : vector<8x256xf32> to vector<1x8x256xf32>
    tpu.vector_store %arg5[%c0_16, %c0_17, %c0_18], %39 {strides = array<i32>} : memref<1x8x256xf32, #tpu.memory_space<vmem>>, vector<1x8x256xf32>,
    return
  }
  func.func @transform_0(%arg0: i32, %arg1: i32) -> (i32, i32, i32) {
    %c0_i32 = arith.constant 0 : i32
    %c0_i32_0 = arith.constant 0 : i32
    %c0_i32_1 = arith.constant 0 : i32
    return %arg0, %c0_i32, %c0_i32_0 : i32, i32, i32
  }
  func.func @transform_1(%arg0: i32, %arg1: i32) -> (i32, i32) {
    %c0_i32 = arith.constant 0 : i32
    %c0_i32_0 = arith.constant 0 : i32
    %c0_i32_1 = arith.constant 0 : i32
    return %c0_i32, %c0_i32_0 : i32, i32
  }
  func.func @transform_2(%arg0: i32, %arg1: i32) -> (i32, i32) {
    %c0_i32 = arith.constant 0 : i32
    %c0_i32_0 = arith.constant 0 : i32
    %c0_i32_1 = arith.constant 0 : i32
    return %c0_i32, %c0_i32_0 : i32, i32
  }
  func.func @transform_3(%arg0: i32, %arg1: i32) -> (i32, i32, i32) {
    %c0_i32 = arith.constant 0 : i32
    %c0_i32_0 = arith.constant 0 : i32
    return %arg0, %arg1, %c0_i32 : i32, i32, i32
  }
}

</mosaic_0001>

<llo_original>
// kernel: tpu_custom_call.1
$region0: #{tpu_custom_call.1}
  #allocation0 [shape = 'u32[]', space=smem, size = 0x4, offset = 0x4, fixed_abs, tag = 'smem constant byte address 0x4 - core index']
  #allocation1 [shape = 'u32[144,128]{1,0:T(1,128)}', space=vmem, size = 0x12000, scoped, tag = 'internal scratch']
  %s0 = inlined_call_operand.vmem [shape: f32[2,4,256], index: 0, kind: input, shape index: {}]
  %s1 = inlined_call_operand.vmem [shape: f32[8,4], index: 1, kind: input, shape index: {}]
  %s2 = inlined_call_operand.vmem [shape: f32[8,1], index: 2, kind: input, shape index: {}]
  %s3 = inlined_call_operand.hbm [shape: f32[2,8,256], index: 3, kind: output, shape index: {}]
  %s4 = sld [smem:[#allocation0]]
  $region45: #{tpu_custom_call.1} parent=0
    _
  %s6 = ssub.s32 1, %s4
  %s7 = scalar_select 0, %s6, %s4
  $region1: #{tpu_custom_call.1} parent=0
    #allocation2 [shape = 'u8[16384]{0}', space=vmem, size = 0x4000, scoped, tag = 'output window, operand 0']
    #allocation3 [shape = 's32[2]{0}', space=sflag, size = 0x8, scoped, tag = 'scoped memory for tpu_custom_call.1']
    %8 = vsyncpa [#allocation3], 0
    %s9 = scalar_lea.sflag [#allocation3], 1
    %10 = vsyncpa %s9, 0
    loop: start=0, step=1, limit=4
    $region2: #{tpu_custom_call.1} parent=1 // loop_pre_header
      _
    $region3: #{tpu_custom_call.1} parent=1 // loop_header
      %s12 = sphi 0, %s16
      %p13 = scmp.ge.s32.totalorder %s12, 4
      %s19 = sphi 0, %s31
      %s20 = sphi 0, %s27
      %s21 = sphi 0, %s19
      %s22 = sphi 0, %s20
      %s23 = sphi 0, %s21
      %s24 = sphi 0, %s22
      %s34 = sphi 0, %s36
      %s37 = sphi 0, %s34
      %s38 = sphi 0, %s37
      %s54 = sphi 0, %s38
      %s58 = sphi 0, %s58
      %s60 = sphi 0, %s58
      %s61 = sphi 0, %s60
      %s75 = sphi 0, %s61
      %s79 = sphi 0, %s79
      %s81 = sphi 0, %s79
      %s82 = sphi 0, %s81
      %s96 = sphi 0, %s82
      %s104 = sphi 0, %s106
      %s107 = sphi 0, %s104
      %s108 = sphi 0, %s107
      %s124 = sphi 0, %s108
    $region4: #{tpu_custom_call.1} parent=1 // loop_header_branch
      %15 = sbr.rel (%p13) target = $region8
    $region5: #{tpu_custom_call.1} parent=1 // loop_body
      %s17 = ssub.s32 %s12, 1
      %s18 = ssub.s32 %s12, 2
      %s25 = sadd.s32 1, %s20
      %p26 = scmp.ge.s32.totalorder %s25, 1
      %s27 = scalar_select %p26, 0, %s25
      %s28 = sadd.s32 1, %s19
      %s29 = scalar_select %p26, %s28, %s19
      %p30 = scmp.ge.s32.totalorder %s29, 2
      %s31 = scalar_select %p30, 0, %s29
      %s32 = ssub.s32 %s19, %s31
      %p33 = scmp.eq.s32.totalorder %s32, 0
      %s35 = sadd.s32 %s34, 1
      %s36 = scalar_select %p33, %s34, %s35
      %p39 = pneg %p33
      %p40 = scmp.eq.s32.totalorder %s12, 1
      %p41 = por %p39, %p40
      %p42 = scmp.ne.s32.totalorder %s34, %s37
      %p43 = scmp.eq.s32.totalorder %s12, 0
      %p44 = por %p42, %p43
      %p45 = scmp.ne.s32.totalorder %s34, %s37
      %p46 = scmp.eq.s32.totalorder %s17, 1
      %p47 = por %p45, %p46
      %p48 = scmp.ne.s32.totalorder %s37, %s38
      %p49 = scmp.eq.s32.totalorder %s17, 0
      %p50 = por %p48, %p49
      %p51 = scmp.ne.s32.totalorder %s37, %s38
      %p52 = scmp.eq.s32.totalorder %s18, 1
      %p53 = por %p51, %p52
      %p55 = scmp.ne.s32.totalorder %s38, %s54
      %p56 = scmp.eq.s32.totalorder %s18, 0
      %p57 = por %p55, %p56
      %s59 = sadd.s32 %s58, 1
      %p62 = scmp.eq.s32.totalorder %s12, 1
      %p63 = scmp.ne.s32.totalorder %s58, %s60
      %p64 = scmp.eq.s32.totalorder %s12, 0
      %p65 = por %p63, %p64
      %p66 = scmp.ne.s32.totalorder %s58, %s60
      %p67 = scmp.eq.s32.totalorder %s17, 1
      %p68 = por %p66, %p67
      %p69 = scmp.ne.s32.totalorder %s60, %s61
      %p70 = scmp.eq.s32.totalorder %s17, 0
      %p71 = por %p69, %p70
      %p72 = scmp.ne.s32.totalorder %s60, %s61
      %p73 = scmp.eq.s32.totalorder %s18, 1
      %p74 = por %p72, %p73
      %p76 = scmp.ne.s32.totalorder %s61, %s75
      %p77 = scmp.eq.s32.totalorder %s18, 0
      %p78 = por %p76, %p77
      %s80 = sadd.s32 %s79, 1
      %p83 = scmp.eq.s32.totalorder %s12, 1
      %p84 = scmp.ne.s32.totalorder %s79, %s81
      %p85 = scmp.eq.s32.totalorder %s12, 0
      %p86 = por %p84, %p85
      %p87 = scmp.ne.s32.totalorder %s79, %s81
      %p88 = scmp.eq.s32.totalorder %s17, 1
      %p89 = por %p87, %p88
      %p90 = scmp.ne.s32.totalorder %s81, %s82
      %p91 = scmp.eq.s32.totalorder %s17, 0
      %p92 = por %p90, %p91
      %p93 = scmp.ne.s32.totalorder %s81, %s82
      %p94 = scmp.eq.s32.totalorder %s18, 1
      %p95 = por %p93, %p94
      %p97 = scmp.ne.s32.totalorder %s82, %s96
      %p98 = scmp.eq.s32.totalorder %s18, 0
      %p99 = por %p97, %p98
      %s100 = ssub.s32 %s19, %s31
      %s101 = ssub.s32 %s20, %s27
      %s102 = sor.u32 %s100, %s101
      %p103 = scmp.eq.s32.totalorder %s102, 0
      %s105 = sadd.s32 %s104, 1
      %s106 = scalar_select %p103, %s104, %s105
      %p109 = pneg %p103
      %p110 = scmp.eq.s32.totalorder %s12, 1
      %p111 = por %p109, %p110
      %p112 = scmp.ne.s32.totalorder %s104, %s107
      %p113 = scmp.eq.s32.totalorder %s12, 0
      %p114 = por %p112, %p113
      %p115 = scmp.ne.s32.totalorder %s104, %s107
      %p116 = scmp.eq.s32.totalorder %s17, 1
      %p117 = por %p115, %p116
      %p118 = scmp.ne.s32.totalorder %s107, %s108
      %p119 = scmp.eq.s32.totalorder %s17, 0
      %p120 = por %p118, %p119
      %p121 = scmp.ne.s32.totalorder %s107, %s108
      %p122 = scmp.eq.s32.totalorder %s18, 1
      %p123 = por %p121, %p122
      %p125 = scmp.ne.s32.totalorder %s108, %s124
      %p126 = scmp.eq.s32.totalorder %s18, 0
      %p127 = por %p125, %p126
      %p128 = scmp.le.s32.totalorder 1, %s12
      %p129 = scmp.lt.s32.totalorder %s12, 3
      %p130 = pnand %p128, %p129
      %p131 = pneg %p130
      // Predicated region
      $region9: #{tpu_custom_call.1} parent=5 // pred_check
        _
      $region10: #{tpu_custom_call.1} parent=5 // pred_check_branch
        %133 = sbr.rel (%p130) target = $region12
      $region11: #{tpu_custom_call.1} parent=5 // pred_region
        %s134 = ssub.s32 %s12, 1
        // Predicated region
        $region13: #{tpu_custom_call.1} parent=11 // pred_check
          %p135 = pneg %p71
        $region14: #{tpu_custom_call.1} parent=11 // pred_check_branch
          %137 = sbr.rel (%p135) target = $region16
        $region15: #{tpu_custom_call.1} parent=11 // pred_region
          _
        $region16: #{tpu_custom_call.1} parent=11 // pred_fallthru
          _
        // Predicated region
        $region17: #{tpu_custom_call.1} parent=11 // pred_check
          %p138 = pneg %p92
        $region18: #{tpu_custom_call.1} parent=11 // pred_check_branch
          %140 = sbr.rel (%p138) target = $region20
        $region19: #{tpu_custom_call.1} parent=11 // pred_region
          _
        $region20: #{tpu_custom_call.1} parent=11 // pred_fallthru
          _
      $region12: #{tpu_custom_call.1} parent=5 // pred_fallthru
        _
      %p141 = scmp.lt.s32.totalorder %s12, 2
      // Predicated region
      $region21: #{tpu_custom_call.1} parent=5 // pred_check
        %p142 = pneg %p141
      $region22: #{tpu_custom_call.1} parent=5 // pred_check_branch
        %144 = sbr.rel (%p142) target = $region24
      $region23: #{tpu_custom_call.1} parent=5 // pred_region
        // Predicated region
        $region25: #{tpu_custom_call.1} parent=23 // pred_check
          %p145 = pneg %p44
        $region26: #{tpu_custom_call.1} parent=23 // pred_check_branch
          %147 = sbr.rel (%p145) target = $region28
        $region27: #{tpu_custom_call.1} parent=23 // pred_region
          %p148 = scmp.lt.s32.totalorder %s19, 1
          %s149 = scalar_select %p148, %s19, 1
          %s150 = smul.addr %s149, 2
          %s151 = smul.addr %s150, 4
          %s152 = scalar_lea.vmem %s0, %s151
        $region28: #{tpu_custom_call.1} parent=23 // pred_fallthru
          _
      $region24: #{tpu_custom_call.1} parent=5 // pred_fallthru
        _
      %p153 = scmp.le.s32.totalorder 1, %s12
      %p154 = scmp.lt.s32.totalorder %s12, 3
      %p155 = pnand %p153, %p154
      %p156 = pneg %p155
      // Predicated region
      $region29: #{tpu_custom_call.1} parent=5 // pred_check
        _
      $region30: #{tpu_custom_call.1} parent=5 // pred_check_branch
        %158 = sbr.rel (%p155) target = $region32
      $region31: #{tpu_custom_call.1} parent=5 // pred_region
        %s159 = ssub.s32 %s12, 1
        %p160 = scmp.lt.s32.totalorder %s21, 1
        %s161 = scalar_select %p160, %s21, 1
        %s162 = smul.addr %s161, 2
        %s163 = smul.addr %s162, 4
        %s164 = scalar_lea.vmem %s0, %s163
        %p165 = pneg %p50
        %p166 = pneg %p47
        %p167 = pneg %p71
        %p168 = pneg %p68
        %p169 = pneg %p92
        %p170 = pneg %p89
        %p171 = pneg %p120
        %p172 = pneg %p117
        %s173 = sand.u32 %s107, 1
        %s174 = scalar_lea.sflag [#allocation3], %s173
        %s175 = sand.u32 %s107, 1
        %s176 = smul.addr %s175, 16
        %s177 = scalar_lea.vmem [#allocation2], %s176
        %p178 = scmp.lt.s32.totalorder %s21, 1
        %s179 = scalar_select %p178, %s21, 1
        %s180 = smul.addr %s179, 2
        %s181 = smul.addr %s180, 4
        %s182 = scalar_lea.vmem %s0, %s181
        %v183 = vld [vmem:[%s182] sm:$0xff]
        %v184 = vld [vmem:[%s1] sm:$0xff]
        %v185 = vld [vmem:[%s2] sm:$0xff]
        %187 = vset.pattern.permute.xlu0 0
        %188 = vperm.xlu0 %187, %v185
        %v189 = vpop.permute.xlu0 %188
        %v192 = vcombine.high %v183, %v183
        %vm193 = vcmask 31744
        %v195 = vsel %vm193, %v184, 0
        %vm197 = vcmask 1043456
        %v198 = vsel %vm197, %v183, 0
        %v200 = vsel %vm197, %v192, 0
        %202 = vmatprep.subr.mxu0 0.0
        %203 = vmatpush1.msra.mxu0 0.0
        %204 = vmatprep.subr.mxu0 0.0
        %205 = vmatpush1.msra.mxu0 0.0
        %206 = vmatprep.subr.mxu0 0.0
        %207 = vmatpush1.msra.mxu0 0.0
        %208 = vmatprep.subr.mxu0 0.0
        %209 = vmatpush1.msra.mxu0 0.0
        %210 = vmatprep.subr.mxu0 0.0
        %211 = vmatpush1.msra.mxu0 0.0
        %212 = vmatprep.subr.mxu0 0.0
        %213 = vmatpush1.msra.mxu0 0.0
        %214 = vmatprep.subr.mxu0 0.0
        %215 = vmatpush1.msra.mxu0 0.0
        %216 = vmatprep.subr.mxu0 0.0
        %217 = vmatpush1.msra.mxu0 0.0
        %218 = vmatprep.subr.mxu0 0.0
        %219 = vmatpush1.msra.mxu0 0.0
        %220 = vmatprep.subr.mxu0 0.0
        %221 = vmatpush1.msra.mxu0 0.0
        %222 = vmatprep.subr.mxu0 0.0
        %223 = vmatpush1.msra.mxu0 0.0
        %224 = vmatprep.subr.mxu0 0.0
        %225 = vmatpush1.msra.mxu0 0.0
        %226 = vmatprep.subr.mxu0 0.0
        %227 = vmatpush1.msra.mxu0 0.0
        %228 = vmatprep.subr.mxu0 0.0
        %229 = vmatpush1.msra.mxu0 0.0
        %230 = vmatprep.subr.mxu0 0.0
        %231 = vmatpush1.msra.mxu0 0.0
        %v232 = vand.u32 %v200, 4294901760
        %233 = vmatprep.subr.mxu0 %v232
        %v234 = vand.u32 %v198, 4294901760
        %235 = vmatpush1.msra.mxu0 %v234
        %236 = vmatprep.subr.mxu0 0.0
        %237 = vmatpush2.msra.mxu0 0.0
        %238 = vmatprep.subr.mxu0 0.0
        %239 = vmatpush2.msra.mxu0 0.0
        %240 = vmatprep.subr.mxu0 0.0
        %241 = vmatpush2.msra.mxu0 0.0
        %242 = vmatprep.subr.mxu0 0.0
        %243 = vmatpush2.msra.mxu0 0.0
        %244 = vmatprep.subr.mxu0 0.0
        %245 = vmatpush2.msra.mxu0 0.0
        %246 = vmatprep.subr.mxu0 0.0
        %247 = vmatpush2.msra.mxu0 0.0
        %248 = vmatprep.subr.mxu0 0.0
        %249 = vmatpush2.msra.mxu0 0.0
        %250 = vmatprep.subr.mxu0 0.0
        %251 = vmatpush2.msra.mxu0 0.0
        %252 = vmatprep.subr.mxu0 0.0
        %253 = vmatpush2.msra.mxu0 0.0
        %254 = vmatprep.subr.mxu0 0.0
        %255 = vmatpush2.msra.mxu0 0.0
        %256 = vmatprep.subr.mxu0 0.0
        %257 = vmatpush2.msra.mxu0 0.0
        %258 = vmatprep.subr.mxu0 0.0
        %259 = vmatpush2.msra.mxu0 0.0
        %260 = vmatprep.subr.mxu0 0.0
        %261 = vmatpush2.msra.mxu0 0.0
        %262 = vmatprep.subr.mxu0 0.0
        %263 = vmatpush2.msra.mxu0 0.0
        %264 = vmatprep.subr.mxu0 0.0
        %265 = vmatpush2.msra.mxu0 0.0
        %266 = vmatprep.subr.mxu0 0.0
        %267 = vmatpush2.msra.mxu0 0.0
        %268 = vmatprep.mubr.f32.mxu0 0.0
        %v269 = vand.u32 %v195, 4294901760
        %v270 = vsub.f32 %v195, %v269
        %v271 = vand.u32 %v270, 4294901760
        %v272 = vsub.f32 %v270, %v271
        %v273 = vand.u32 %v272, 4294901760
        %274 = vmatmul.mubr.f32.gmra.mxu0 %v273
        %v275 = vpop.f32.mrf.mxu0
        %v276 = vadd.f32 %v189, %v275
        %v277 = vpop.f32.mrf.mxu0
        %v278 = vadd.f32 %v189, %v277
        %279 = vdwg.mxu0
        %280 = vmatprep.subr.mxu0 0.0
        %281 = vmatpush1.msra.mxu0 0.0
        %282 = vmatprep.subr.mxu0 0.0
        %283 = vmatpush1.msra.mxu0 0.0
        %284 = vmatprep.subr.mxu0 0.0
        %285 = vmatpush1.msra.mxu0 0.0
        %286 = vmatprep.subr.mxu0 0.0
        %287 = vmatpush1.msra.mxu0 0.0
        %288 = vmatprep.subr.mxu0 0.0
        %289 = vmatpush1.msra.mxu0 0.0
        %290 = vmatprep.subr.mxu0 0.0
        %291 = vmatpush1.msra.mxu0 0.0
        %292 = vmatprep.subr.mxu0 0.0
        %293 = vmatpush1.msra.mxu0 0.0
        %294 = vmatprep.subr.mxu0 0.0
        %295 = vmatpush1.msra.mxu0 0.0
        %296 = vmatprep.subr.mxu0 0.0
        %297 = vmatpush1.msra.mxu0 0.0
        %298 = vmatprep.subr.mxu0 0.0
        %299 = vmatpush1.msra.mxu0 0.0
        %300 = vmatprep.subr.mxu0 0.0
        %301 = vmatpush1.msra.mxu0 0.0
        %302 = vmatprep.subr.mxu0 0.0
        %303 = vmatpush1.msra.mxu0 0.0
        %304 = vmatprep.subr.mxu0 0.0
        %305 = vmatpush1.msra.mxu0 0.0
        %306 = vmatprep.subr.mxu0 0.0
        %307 = vmatpush1.msra.mxu0 0.0
        %308 = vmatprep.subr.mxu0 0.0
        %309 = vmatpush1.msra.mxu0 0.0
        %v310 = vand.u32 %v200, 4294901760
        %v311 = vsub.f32 %v200, %v310
        %v312 = vand.u32 %v311, 4294901760
        %v313 = vsub.f32 %v311, %v312
        %v314 = vand.u32 %v313, 4294901760
        %315 = vmatprep.subr.mxu0 %v314
        %v316 = vand.u32 %v198, 4294901760
        %v317 = vsub.f32 %v198, %v316
        %v318 = vand.u32 %v317, 4294901760
        %v319 = vsub.f32 %v317, %v318
        %v320 = vand.u32 %v319, 4294901760
        %321 = vmatpush1.msra.mxu0 %v320
        %322 = vmatprep.subr.mxu0 0.0
        %323 = vmatpush2.msra.mxu0 0.0
        %324 = vmatprep.subr.mxu0 0.0
        %325 = vmatpush2.msra.mxu0 0.0
        %326 = vmatprep.subr.mxu0 0.0
        %327 = vmatpush2.msra.mxu0 0.0
        %328 = vmatprep.subr.mxu0 0.0
        %329 = vmatpush2.msra.mxu0 0.0
        %330 = vmatprep.subr.mxu0 0.0
        %331 = vmatpush2.msra.mxu0 0.0
        %332 = vmatprep.subr.mxu0 0.0
        %333 = vmatpush2.msra.mxu0 0.0
        %334 = vmatprep.subr.mxu0 0.0
        %335 = vmatpush2.msra.mxu0 0.0
        %336 = vmatprep.subr.mxu0 0.0
        %337 = vmatpush2.msra.mxu0 0.0
        %338 = vmatprep.subr.mxu0 0.0
        %339 = vmatpush2.msra.mxu0 0.0
        %340 = vmatprep.subr.mxu0 0.0
        %341 = vmatpush2.msra.mxu0 0.0
        %342 = vmatprep.subr.mxu0 0.0
        %343 = vmatpush2.msra.mxu0 0.0
        %344 = vmatprep.subr.mxu0 0.0
        %345 = vmatpush2.msra.mxu0 0.0
        %346 = vmatprep.subr.mxu0 0.0
        %347 = vmatpush2.msra.mxu0 0.0
        %348 = vmatprep.subr.mxu0 0.0
        %349 = vmatpush2.msra.mxu0 0.0
        %350 = vmatprep.subr.mxu0 0.0
        %351 = vmatpush2.msra.mxu0 0.0
        %352 = vmatprep.subr.mxu0 0.0
        %353 = vmatpush2.msra.mxu0 0.0
        %354 = vmatprep.mubr.f32.mxu0 0.0
        %v355 = vand.u32 %v195, 4294901760
        %356 = vmatmul.mubr.f32.gmra.mxu0 %v355
        %v357 = vpop.f32.mrf.mxu0
        %v358 = vadd.f32 %v276, %v357
        %v359 = vpop.f32.mrf.mxu0
        %v360 = vadd.f32 %v278, %v359
        %361 = vdwg.mxu0
        %362 = vmatprep.subr.mxu0 0.0
        %363 = vmatpush1.msra.mxu0 0.0
        %364 = vmatprep.subr.mxu0 0.0
        %365 = vmatpush1.msra.mxu0 0.0
        %366 = vmatprep.subr.mxu0 0.0
        %367 = vmatpush1.msra.mxu0 0.0
        %368 = vmatprep.subr.mxu0 0.0
        %369 = vmatpush1.msra.mxu0 0.0
        %370 = vmatprep.subr.mxu0 0.0
        %371 = vmatpush1.msra.mxu0 0.0
        %372 = vmatprep.subr.mxu0 0.0
        %373 = vmatpush1.msra.mxu0 0.0
        %374 = vmatprep.subr.mxu0 0.0
        %375 = vmatpush1.msra.mxu0 0.0
        %376 = vmatprep.subr.mxu0 0.0
        %377 = vmatpush1.msra.mxu0 0.0
        %378 = vmatprep.subr.mxu0 0.0
        %379 = vmatpush1.msra.mxu0 0.0
        %380 = vmatprep.subr.mxu0 0.0
        %381 = vmatpush1.msra.mxu0 0.0
        %382 = vmatprep.subr.mxu0 0.0
        %383 = vmatpush1.msra.mxu0 0.0
        %384 = vmatprep.subr.mxu0 0.0
        %385 = vmatpush1.msra.mxu0 0.0
        %386 = vmatprep.subr.mxu0 0.0
        %387 = vmatpush1.msra.mxu0 0.0
        %388 = vmatprep.subr.mxu0 0.0
        %389 = vmatpush1.msra.mxu0 0.0
        %390 = vmatprep.subr.mxu0 0.0
        %391 = vmatpush1.msra.mxu0 0.0
        %v392 = vand.u32 %v200, 4294901760
        %v393 = vsub.f32 %v200, %v392
        %394 = vmatprep.subr.mxu0 %v393
        %v395 = vand.u32 %v198, 4294901760
        %v396 = vsub.f32 %v198, %v395
        %397 = vmatpush1.msra.mxu0 %v396
        %398 = vmatprep.subr.mxu0 0.0
        %399 = vmatpush2.msra.mxu0 0.0
        %400 = vmatprep.subr.mxu0 0.0
        %401 = vmatpush2.msra.mxu0 0.0
        %402 = vmatprep.subr.mxu0 0.0
        %403 = vmatpush2.msra.mxu0 0.0
        %404 = vmatprep.subr.mxu0 0.0
        %405 = vmatpush2.msra.mxu0 0.0
        %406 = vmatprep.subr.mxu0 0.0
        %407 = vmatpush2.msra.mxu0 0.0
        %408 = vmatprep.subr.mxu0 0.0
        %409 = vmatpush2.msra.mxu0 0.0
        %410 = vmatprep.subr.mxu0 0.0
        %411 = vmatpush2.msra.mxu0 0.0
        %412 = vmatprep.subr.mxu0 0.0
        %413 = vmatpush2.msra.mxu0 0.0
        %414 = vmatprep.subr.mxu0 0.0
        %415 = vmatpush2.msra.mxu0 0.0
        %416 = vmatprep.subr.mxu0 0.0
        %417 = vmatpush2.msra.mxu0 0.0
        %418 = vmatprep.subr.mxu0 0.0
        %419 = vmatpush2.msra.mxu0 0.0
        %420 = vmatprep.subr.mxu0 0.0
        %421 = vmatpush2.msra.mxu0 0.0
        %422 = vmatprep.subr.mxu0 0.0
        %423 = vmatpush2.msra.mxu0 0.0
        %424 = vmatprep.subr.mxu0 0.0
        %425 = vmatpush2.msra.mxu0 0.0
        %426 = vmatprep.subr.mxu0 0.0
        %427 = vmatpush2.msra.mxu0 0.0
        %428 = vmatprep.subr.mxu0 0.0
        %429 = vmatpush2.msra.mxu0 0.0
        %430 = vmatprep.mubr.f32.mxu0 0.0
        %v431 = vand.u32 %v195, 4294901760
        %v432 = vsub.f32 %v195, %v431
        %433 = vmatmul.mubr.f32.gmra.mxu0 %v432
        %v434 = vpop.f32.mrf.mxu0
        %v435 = vadd.f32 %v358, %v434
        %v436 = vpop.f32.mrf.mxu0
        %v437 = vadd.f32 %v360, %v436
        %438 = vdwg.mxu0
        %439 = vmatprep.subr.mxu0 0.0
        %440 = vmatpush1.msra.mxu0 0.0
        %441 = vmatprep.subr.mxu0 0.0
        %442 = vmatpush1.msra.mxu0 0.0
        %443 = vmatprep.subr.mxu0 0.0
        %444 = vmatpush1.msra.mxu0 0.0
        %445 = vmatprep.subr.mxu0 0.0
        %446 = vmatpush1.msra.mxu0 0.0
        %447 = vmatprep.subr.mxu0 0.0
        %448 = vmatpush1.msra.mxu0 0.0
        %449 = vmatprep.subr.mxu0 0.0
        %450 = vmatpush1.msra.mxu0 0.0
        %451 = vmatprep.subr.mxu0 0.0
        %452 = vmatpush1.msra.mxu0 0.0
        %453 = vmatprep.subr.mxu0 0.0
        %454 = vmatpush1.msra.mxu0 0.0
        %455 = vmatprep.subr.mxu0 0.0
        %456 = vmatpush1.msra.mxu0 0.0
        %457 = vmatprep.subr.mxu0 0.0
        %458 = vmatpush1.msra.mxu0 0.0
        %459 = vmatprep.subr.mxu0 0.0
        %460 = vmatpush1.msra.mxu0 0.0
        %461 = vmatprep.subr.mxu0 0.0
        %462 = vmatpush1.msra.mxu0 0.0
        %463 = vmatprep.subr.mxu0 0.0
        %464 = vmatpush1.msra.mxu0 0.0
        %465 = vmatprep.subr.mxu0 0.0
        %466 = vmatpush1.msra.mxu0 0.0
        %467 = vmatprep.subr.mxu0 0.0
        %468 = vmatpush1.msra.mxu0 0.0
        %v469 = vand.u32 %v200, 4294901760
        %470 = vmatprep.subr.mxu0 %v469
        %v471 = vand.u32 %v198, 4294901760
        %472 = vmatpush1.msra.mxu0 %v471
        %473 = vmatprep.subr.mxu0 0.0
        %474 = vmatpush2.msra.mxu0 0.0
        %475 = vmatprep.subr.mxu0 0.0
        %476 = vmatpush2.msra.mxu0 0.0
        %477 = vmatprep.subr.mxu0 0.0
        %478 = vmatpush2.msra.mxu0 0.0
        %479 = vmatprep.subr.mxu0 0.0
        %480 = vmatpush2.msra.mxu0 0.0
        %481 = vmatprep.subr.mxu0 0.0
        %482 = vmatpush2.msra.mxu0 0.0
        %483 = vmatprep.subr.mxu0 0.0
        %484 = vmatpush2.msra.mxu0 0.0
        %485 = vmatprep.subr.mxu0 0.0
        %486 = vmatpush2.msra.mxu0 0.0
        %487 = vmatprep.subr.mxu0 0.0
        %488 = vmatpush2.msra.mxu0 0.0
        %489 = vmatprep.subr.mxu0 0.0
        %490 = vmatpush2.msra.mxu0 0.0
        %491 = vmatprep.subr.mxu0 0.0
        %492 = vmatpush2.msra.mxu0 0.0
        %493 = vmatprep.subr.mxu0 0.0
        %494 = vmatpush2.msra.mxu0 0.0
        %495 = vmatprep.subr.mxu0 0.0
        %496 = vmatpush2.msra.mxu0 0.0
        %497 = vmatprep.subr.mxu0 0.0
        %498 = vmatpush2.msra.mxu0 0.0
        %499 = vmatprep.subr.mxu0 0.0
        %500 = vmatpush2.msra.mxu0 0.0
        %501 = vmatprep.subr.mxu0 0.0
        %502 = vmatpush2.msra.mxu0 0.0
        %503 = vmatprep.subr.mxu0 0.0
        %504 = vmatpush2.msra.mxu0 0.0
        %505 = vmatprep.mubr.f32.mxu0 0.0
        %v506 = vand.u32 %v195, 4294901760
        %v507 = vsub.f32 %v195, %v506
        %v508 = vand.u32 %v507, 4294901760
        %509 = vmatmul.mubr.f32.gmra.mxu0 %v508
        %v510 = vpop.f32.mrf.mxu0
        %v511 = vadd.f32 %v435, %v510
        %v512 = vpop.f32.mrf.mxu0
        %v513 = vadd.f32 %v437, %v512
        %514 = vdwg.mxu0
        %515 = vmatprep.subr.mxu0 0.0
        %516 = vmatpush1.msra.mxu0 0.0
        %517 = vmatprep.subr.mxu0 0.0
        %518 = vmatpush1.msra.mxu0 0.0
        %519 = vmatprep.subr.mxu0 0.0
        %520 = vmatpush1.msra.mxu0 0.0
        %521 = vmatprep.subr.mxu0 0.0
        %522 = vmatpush1.msra.mxu0 0.0
        %523 = vmatprep.subr.mxu0 0.0
        %524 = vmatpush1.msra.mxu0 0.0
        %525 = vmatprep.subr.mxu0 0.0
        %526 = vmatpush1.msra.mxu0 0.0
        %527 = vmatprep.subr.mxu0 0.0
        %528 = vmatpush1.msra.mxu0 0.0
        %529 = vmatprep.subr.mxu0 0.0
        %530 = vmatpush1.msra.mxu0 0.0
        %531 = vmatprep.subr.mxu0 0.0
        %532 = vmatpush1.msra.mxu0 0.0
        %533 = vmatprep.subr.mxu0 0.0
        %534 = vmatpush1.msra.mxu0 0.0
        %535 = vmatprep.subr.mxu0 0.0
        %536 = vmatpush1.msra.mxu0 0.0
        %537 = vmatprep.subr.mxu0 0.0
        %538 = vmatpush1.msra.mxu0 0.0
        %539 = vmatprep.subr.mxu0 0.0
        %540 = vmatpush1.msra.mxu0 0.0
        %541 = vmatprep.subr.mxu0 0.0
        %542 = vmatpush1.msra.mxu0 0.0
        %543 = vmatprep.subr.mxu0 0.0
        %544 = vmatpush1.msra.mxu0 0.0
        %v545 = vand.u32 %v200, 4294901760
        %v546 = vsub.f32 %v200, %v545
        %v547 = vand.u32 %v546, 4294901760
        %548 = vmatprep.subr.mxu0 %v547
        %v549 = vand.u32 %v198, 4294901760
        %v550 = vsub.f32 %v198, %v549
        %v551 = vand.u32 %v550, 4294901760
        %552 = vmatpush1.msra.mxu0 %v551
        %553 = vmatprep.subr.mxu0 0.0
        %554 = vmatpush2.msra.mxu0 0.0
        %555 = vmatprep.subr.mxu0 0.0
        %556 = vmatpush2.msra.mxu0 0.0
        %557 = vmatprep.subr.mxu0 0.0
        %558 = vmatpush2.msra.mxu0 0.0
        %559 = vmatprep.subr.mxu0 0.0
        %560 = vmatpush2.msra.mxu0 0.0
        %561 = vmatprep.subr.mxu0 0.0
        %562 = vmatpush2.msra.mxu0 0.0
        %563 = vmatprep.subr.mxu0 0.0
        %564 = vmatpush2.msra.mxu0 0.0
        %565 = vmatprep.subr.mxu0 0.0
        %566 = vmatpush2.msra.mxu0 0.0
        %567 = vmatprep.subr.mxu0 0.0
        %568 = vmatpush2.msra.mxu0 0.0
        %569 = vmatprep.subr.mxu0 0.0
        %570 = vmatpush2.msra.mxu0 0.0
        %571 = vmatprep.subr.mxu0 0.0
        %572 = vmatpush2.msra.mxu0 0.0
        %573 = vmatprep.subr.mxu0 0.0
        %574 = vmatpush2.msra.mxu0 0.0
        %575 = vmatprep.subr.mxu0 0.0
        %576 = vmatpush2.msra.mxu0 0.0
        %577 = vmatprep.subr.mxu0 0.0
        %578 = vmatpush2.msra.mxu0 0.0
        %579 = vmatprep.subr.mxu0 0.0
        %580 = vmatpush2.msra.mxu0 0.0
        %581 = vmatprep.subr.mxu0 0.0
        %582 = vmatpush2.msra.mxu0 0.0
        %583 = vmatprep.subr.mxu0 0.0
        %584 = vmatpush2.msra.mxu0 0.0
        %585 = vmatprep.mubr.f32.mxu0 0.0
        %v586 = vand.u32 %v195, 4294901760
        %587 = vmatmul.mubr.f32.gmra.mxu0 %v586
        %v588 = vpop.f32.mrf.mxu0
        %v589 = vadd.f32 %v511, %v588
        %v590 = vpop.f32.mrf.mxu0
        %v591 = vadd.f32 %v513, %v590
        %592 = vdwg.mxu0
        %593 = vmatprep.subr.mxu0 0.0
        %594 = vmatpush1.msra.mxu0 0.0
        %595 = vmatprep.subr.mxu0 0.0
        %596 = vmatpush1.msra.mxu0 0.0
        %597 = vmatprep.subr.mxu0 0.0
        %598 = vmatpush1.msra.mxu0 0.0
        %599 = vmatprep.subr.mxu0 0.0
        %600 = vmatpush1.msra.mxu0 0.0
        %601 = vmatprep.subr.mxu0 0.0
        %602 = vmatpush1.msra.mxu0 0.0
        %603 = vmatprep.subr.mxu0 0.0
        %604 = vmatpush1.msra.mxu0 0.0
        %605 = vmatprep.subr.mxu0 0.0
        %606 = vmatpush1.msra.mxu0 0.0
        %607 = vmatprep.subr.mxu0 0.0
        %608 = vmatpush1.msra.mxu0 0.0
        %609 = vmatprep.subr.mxu0 0.0
        %610 = vmatpush1.msra.mxu0 0.0
        %611 = vmatprep.subr.mxu0 0.0
        %612 = vmatpush1.msra.mxu0 0.0
        %613 = vmatprep.subr.mxu0 0.0
        %614 = vmatpush1.msra.mxu0 0.0
        %615 = vmatprep.subr.mxu0 0.0
        %616 = vmatpush1.msra.mxu0 0.0
        %617 = vmatprep.subr.mxu0 0.0
        %618 = vmatpush1.msra.mxu0 0.0
        %619 = vmatprep.subr.mxu0 0.0
        %620 = vmatpush1.msra.mxu0 0.0
        %621 = vmatprep.subr.mxu0 0.0
        %622 = vmatpush1.msra.mxu0 0.0
        %v623 = vand.u32 %v200, 4294901760
        %624 = vmatprep.subr.mxu0 %v623
        %v625 = vand.u32 %v198, 4294901760
        %626 = vmatpush1.msra.mxu0 %v625
        %627 = vmatprep.subr.mxu0 0.0
        %628 = vmatpush2.msra.mxu0 0.0
        %629 = vmatprep.subr.mxu0 0.0
        %630 = vmatpush2.msra.mxu0 0.0
        %631 = vmatprep.subr.mxu0 0.0
        %632 = vmatpush2.msra.mxu0 0.0
        %633 = vmatprep.subr.mxu0 0.0
        %634 = vmatpush2.msra.mxu0 0.0
        %635 = vmatprep.subr.mxu0 0.0
        %636 = vmatpush2.msra.mxu0 0.0
        %637 = vmatprep.subr.mxu0 0.0
        %638 = vmatpush2.msra.mxu0 0.0
        %639 = vmatprep.subr.mxu0 0.0
        %640 = vmatpush2.msra.mxu0 0.0
        %641 = vmatprep.subr.mxu0 0.0
        %642 = vmatpush2.msra.mxu0 0.0
        %643 = vmatprep.subr.mxu0 0.0
        %644 = vmatpush2.msra.mxu0 0.0
        %645 = vmatprep.subr.mxu0 0.0
        %646 = vmatpush2.msra.mxu0 0.0
        %647 = vmatprep.subr.mxu0 0.0
        %648 = vmatpush2.msra.mxu0 0.0
        %649 = vmatprep.subr.mxu0 0.0
        %650 = vmatpush2.msra.mxu0 0.0
        %651 = vmatprep.subr.mxu0 0.0
        %652 = vmatpush2.msra.mxu0 0.0
        %653 = vmatprep.subr.mxu0 0.0
        %654 = vmatpush2.msra.mxu0 0.0
        %655 = vmatprep.subr.mxu0 0.0
        %656 = vmatpush2.msra.mxu0 0.0
        %657 = vmatprep.subr.mxu0 0.0
        %658 = vmatpush2.msra.mxu0 0.0
        %659 = vmatprep.mubr.f32.mxu0 0.0
        %v660 = vand.u32 %v195, 4294901760
        %661 = vmatmul.mubr.f32.gmra.mxu0 %v660
        %v662 = vpop.f32.mrf.mxu0
        %v663 = vadd.f32 %v589, %v662
        %v664 = vpop.f32.mrf.mxu0
        %v665 = vadd.f32 %v591, %v664
        %666 = vdwg.mxu0
        %v667 = vmax.f32 %v663, 0.0
        %v668 = vmax.f32 %v665, 0.0
        %v669 = vadd.f32 %v667, %v668
        %670 = vadd.xlane.f32.xlu0 %v669
        %v671 = vpop.xlane.xlu0 %670
        %v672 = vmul.f32 %v671, 0.00390625
        %v673 = vsub.f32 %v667, %v672
        %v674 = vsub.f32 %v668, %v672
        %v675 = vmul.f32 %v673, %v673
        %v676 = vmul.f32 %v674, %v674
        %v677 = vadd.f32 %v675, %v676
        %678 = vadd.xlane.f32.xlu0 %v677
        %v679 = vpop.xlane.xlu0 %678
        %v680 = vrcp.pop 255.0
        %v681 = vmul.f32 %v679, %v680
        %v682 = vadd.f32 %v681, 0.0001
        %v683 = vmul.f32 %v682, 4.0
        %v684 = vadd.f32 %v683, 1e-08
        %v685 = vrcp.pop %v684
        %v686 = vmul.f32 %v675, %v685
        %v687 = vmul.f32 %v676, %v685
        %v688 = vadd.f32 %v686, 0.5
        %v689 = vadd.f32 %v687, 0.5
        %v690 = vxor.u32 %v688, 2147483648
        %v691 = vxor.u32 %v689, 2147483648
        %v692 = vmul.f32 %v690, 1.442695
        %v693 = vpow.pop %v692
        %v694 = vmul.f32 %v691, 1.442695
        %v695 = vpow.pop %v694
        %v696 = vadd.f32 %v693, 1.0
        %v697 = vadd.f32 %v695, 1.0
        %v698 = vrcp.pop %v696
        %v699 = vmul.f32 1.0, %v698
        %v700 = vrcp.pop %v697
        %v701 = vmul.f32 1.0, %v700
        %v702 = vmul.f32 %v667, %v699
        %v703 = vmul.f32 %v668, %v701
        %704 = vst [vmem:[%s177] sm:$0xff] %v702
        %705 = vst [vmem:[%s177 + $0x8] sm:$0xff] %v703
        %s706 = sand.u32 %s107, 1
        %s707 = scalar_lea.sflag [#allocation3], %s706
        %s708 = sand.u32 %s107, 1
        %s709 = smul.addr %s708, 16
        %s710 = scalar_lea.vmem [#allocation2], %s709
        // Predicated region
        $region33: #{tpu_custom_call.1} parent=31 // pred_check
          %p711 = pneg %p117
        $region34: #{tpu_custom_call.1} parent=31 // pred_check_branch
          %713 = sbr.rel (%p711) target = $region36
        $region35: #{tpu_custom_call.1} parent=31 // pred_region
          %s715 = ssub.s32 256, 256
          %716 = vsyncadd %s707, %s715
          %s717 = smul.addr %s22, 2
          %s718 = smul.addr %s21, 2
          %s719 = sadd.s32 %s717, %s718
          %s720 = smul.addr %s719, 128
          %s721 = scalar_lea.hbm %s3, %s720
          %s723 = sshll.u32 %s710, 4
          %s724 = int_to_ptr.vmem [resolvable:$true] %s723
          %726 = dma.vmem_to_hbm [thread:$0]  %s724, 256, %s721, %s707
        $region36: #{tpu_custom_call.1} parent=31 // pred_fallthru
          _
      $region32: #{tpu_custom_call.1} parent=5 // pred_fallthru
        _
      %p727 = scmp.le.s32.totalorder 2, %s12
      // Predicated region
      $region37: #{tpu_custom_call.1} parent=5 // pred_check
        %p728 = pneg %p727
      $region38: #{tpu_custom_call.1} parent=5 // pred_check_branch
        %730 = sbr.rel (%p728) target = $region40
      $region39: #{tpu_custom_call.1} parent=5 // pred_region
        %s731 = ssub.s32 %s12, 2
        // Predicated region
        $region41: #{tpu_custom_call.1} parent=39 // pred_check
          %p732 = pneg %p123
        $region42: #{tpu_custom_call.1} parent=39 // pred_check_branch
          %734 = sbr.rel (%p732) target = $region44
        $region43: #{tpu_custom_call.1} parent=39 // pred_region
          %s735 = sand.u32 %s108, 1
          %s736 = scalar_lea.sflag [#allocation3], %s735
          %s737 = sand.u32 %s108, 1
          %s738 = smul.addr %s737, 16
          %s739 = scalar_lea.vmem [#allocation2], %s738
          %740 = dma.done %s736, 256
        $region44: #{tpu_custom_call.1} parent=39 // pred_fallthru
          _
      $region40: #{tpu_custom_call.1} parent=5 // pred_fallthru
        _
    $region6: #{tpu_custom_call.1} parent=1 // loop_footer
      %s16 = sadd.s32 1, %s12
    $region7: #{tpu_custom_call.1} parent=1 // loop_footer_branch
      %11 = sbr.rel target = $region3
    $region8: #{tpu_custom_call.1} parent=1 // loop_exit
      _
    %741 = vsyncpa [#allocation3], 1
    %s742 = scalar_lea.sflag [#allocation3], 1
    %743 = vsyncpa %s742, 1

</llo_original>
